<compile_context>
chip_gen: v7x
topology: tpu7x:2x2x1
jax: 0.10.0
libtpu: 0.0.40
codegen_flags: <defaults>
</compile_context>

<pallas_src>
import jax
import jax.numpy as jnp
from jax.experimental import pallas as pl
from jax.experimental.pallas import tpu as pltpu


def _make_kernel(s_total, tile_s):
    """Build the kernel closure for a given (static) spatial size / tile."""
    needs_mask = (s_total % tile_s) != 0
    inv_s = 1.0 / float(s_total)
    neg_inf = float("-inf")

    def kernel(x_ref, w1a_ref, w1b_ref, b1_ref, w2t_ref, b2_ref, o_ref,
               sum_acc, max_acc):
        # x_ref:  (1, C, TILE_S)          block of one sample
        # w1a/w1b:(C, hidden)             fc1 weight halves (avg / max inputs)
        # b1_ref: (1, hidden)
        # w2t_ref:(C, hidden)             fc2 weight, torch (out, in) layout
        # b2_ref: (C, 1)
        # o_ref:  (1, C, 1)
        # sum_acc / max_acc: (C, 1) f32 scratch
        k = pl.program_id(1)
        nk = pl.num_programs(1)

        @pl.when(k == 0)
        def _init():
            sum_acc[...] = jnp.zeros(sum_acc.shape, sum_acc.dtype)
            max_acc[...] = jnp.full(max_acc.shape, neg_inf, max_acc.dtype)

        x = x_ref[0].astype(jnp.float32)  # (C, TILE_S)

        if needs_mask:
            col = jax.lax.broadcasted_iota(jnp.int32, x.shape, 1)
            valid = (k * tile_s + col) < s_total
            x_for_sum = jnp.where(valid, x, 0.0)
            x_for_max = jnp.where(valid, x, neg_inf)
        else:
            x_for_sum = x
            x_for_max = x

        # Running reductions over the spatial (lane) axis: one cross-lane
        # reduce per tile, accumulated in f32 VMEM scratch.
        sum_acc[...] += jnp.sum(x_for_sum, axis=-1, keepdims=True)
        max_acc[...] = jnp.maximum(
            max_acc[...], jnp.max(x_for_max, axis=-1, keepdims=True))

        @pl.when(k == nk - 1)
        def _finalize():
            x_avg = sum_acc[...] * inv_s          # (C, 1)  divide once, here
            x_max = max_acc[...]                  # (C, 1)
            # fc1: h[j] = sum_c avg[c]*W1a[c,j] + max[c]*W1b[c,j] + b1[j]
            h = jnp.sum(w1a_ref[...] * x_avg + w1b_ref[...] * x_max,
                        axis=0, keepdims=True) + b1_ref[...]       # (1, hidden)
            h = jnp.maximum(h, 0.0)
            # fc2: y[i] = sum_j h[j]*W2t[i,j] + b2[i]
            y = jnp.sum(w2t_ref[...] * h, axis=1, keepdims=True) + b2_ref[...]
            o_ref[...] = jax.nn.sigmoid(y)[None].astype(o_ref.dtype)  # (1,C,1)

    return kernel


def channel_attention(x, w1, b1, w2, b2, *, tile_s=None,
                      block_budget_bytes=4 << 20):
    """x: (N, C, D, H, W). Returns (N, C) channel-attention weights.

    w1: (2C, hidden), b1: (hidden,), w2: (hidden, C), b2: (C,)  -- weights
    stored transposed relative to torch (in_features, out_features).
    """
    n, c = int(x.shape[0]), int(x.shape[1])
    s = int(x.shape[2]) * int(x.shape[3]) * int(x.shape[4])
    hidden = int(w1.shape[1])

    x_flat = x.reshape(n, c, s)

    # Pick the spatial tile: largest multiple of 128 whose (C, TILE_S) block
    # stays under the per-block budget (double buffering + the tiny weights
    # fit comfortably inside the default scoped-VMEM limit on v5e/v6e/v7x).
    if tile_s is None:
        bytes_per_col = c * x.dtype.itemsize
        max_cols = max(128, (block_budget_bytes // bytes_per_col) // 128 * 128)
        tile_s = s if s <= max_cols else max_cols
    else:
        tile_s = min(int(tile_s), s)
        if tile_s < s and tile_s % 128 != 0:
            raise ValueError("tile_s must be a multiple of 128 (or >= S)")

    nk = pl.cdiv(s, tile_s)

    # Split / re-layout the tiny MLP parameters once, on the host side.
    w1_avg = w1[:c]                 # (C, hidden)
    w1_max = w1[c:]                 # (C, hidden)
    b1_row = b1.reshape(1, hidden)  # (1, hidden)
    w2_t = w2.T                     # (C, hidden)  torch (out, in) orientation
    b2_col = b2.reshape(c, 1)       # (C, 1)

    kernel = _make_kernel(s, tile_s)

    out = pl.pallas_call(
        kernel,
        out_shape=jax.ShapeDtypeStruct((n, c, 1), x.dtype),
        grid_spec=pltpu.PrefetchScalarGridSpec(
            num_scalar_prefetch=0,
            grid=(n, nk),
            in_specs=[
                pl.BlockSpec((1, c, tile_s), lambda i, k: (i, 0, k)),
                pl.BlockSpec((c, hidden), lambda i, k: (0, 0)),
                pl.BlockSpec((c, hidden), lambda i, k: (0, 0)),
                pl.BlockSpec((1, hidden), lambda i, k: (0, 0)),
                pl.BlockSpec((c, hidden), lambda i, k: (0, 0)),
                pl.BlockSpec((c, 1), lambda i, k: (0, 0)),
            ],
            out_specs=pl.BlockSpec((1, c, 1), lambda i, k: (i, 0, 0)),
            scratch_shapes=[
                pltpu.VMEM((c, 1), jnp.float32),   # running sum
                pltpu.VMEM((c, 1), jnp.float32),   # running max
            ],
        ),
        compiler_params=pltpu.CompilerParams(
            dimension_semantics=("parallel", "arbitrary"),
        ),
    )(x_flat, w1_avg, w1_max, b1_row, w2_t, b2_col)

    return out.reshape(n, c)


def reference(x, w1, b1, w2, b2):
    n, c = x.shape[0], x.shape[1]
    xf = x.reshape(n, c, -1)
    x_avg = jnp.mean(xf, axis=-1)
    x_max = jnp.max(xf, axis=-1)
    feat = jnp.concatenate([x_avg, x_max], axis=1)
    h = jnp.maximum(feat @ w1 + b1, 0.0)
    return jax.nn.sigmoid(h @ w2 + b2)


if __name__ == "__main__":
    # Small shapes consistent with the module: batch=2, channels=4, D=H=W=16.
    N, C, D, H, W = 2, 4, 16, 16, 16
    ratio = 2
    hidden = C * 2 * ratio  # fc1 out features = in_channels*2*ratio

    key = jax.random.PRNGKey(0)
    kx, k1, k2, k3, k4 = jax.random.split(key, 5)

    x = jax.random.normal(kx, (N, C, D, H, W), dtype=jnp.float32)
    # Deterministic synthetic parameters (Linear shapes from __init__),
    # stored transposed: (in_features, out_features).
    w1 = jax.random.normal(k1, (C * 2, hidden), dtype=jnp.float32) * 0.1
    b1 = jax.random.normal(k2, (hidden,), dtype=jnp.float32) * 0.1
    w2 = jax.random.normal(k3, (hidden, C), dtype=jnp.float32) * 0.1
    b2 = jax.random.normal(k4, (C,), dtype=jnp.float32) * 0.1

    ref = reference(x, w1, b1, w2, b2)

    # 1) Auto-sized tile (single spatial tile for this small S = 4096).
    out = jax.block_until_ready(channel_attention(x, w1, b1, w2, b2))
    assert out.shape == (N, C)
    assert jnp.allclose(out, ref, atol=2e-5, rtol=1e-5), "mismatch (auto tile)"

    # 2) Multi-tile + ragged-tail path: tile 768 does not divide 4096, so the
    #    last tile is masked (covers the pipelined running-reduction path).
    out_tiled = jax.block_until_ready(
        channel_attention(x, w1, b1, w2, b2, tile_s=768))
    assert jnp.allclose(out_tiled, ref, atol=2e-5, rtol=1e-5), "mismatch (tiled)"

    print("KERNEL_OK")
</pallas_src>

<mosaic_0001>
module attributes {stable_mosaic.version = 11 : i64} {
  func.func @kernel(%arg0: i32, %arg1: i32, %arg2: memref<1x4x4096xf32, #tpu.memory_space<vmem>>, %arg3: memref<4x16xf32, #tpu.memory_space<vmem>>, %arg4: memref<4x16xf32, #tpu.memory_space<vmem>>, %arg5: memref<1x16xf32, #tpu.memory_space<vmem>>, %arg6: memref<4x16xf32, #tpu.memory_space<vmem>>, %arg7: memref<4x1xf32, #tpu.memory_space<vmem>>, %arg8: memref<1x4x1xf32, #tpu.memory_space<vmem>>, %arg9: memref<4x1xf32, #tpu.memory_space<vmem>>, %arg10: memref<4x1xf32, #tpu.memory_space<vmem>>) attributes {dimension_semantics = [#tpu.dimension_semantics<parallel>, #tpu.dimension_semantics<arbitrary>], iteration_bounds = array<i64: 2, 1>, scalar_prefetch = 0 : i64, scratch_operands = 2 : i64, tpu.core_type = #tpu.core_type<tc>, window_params = [{transform_indices = @transform_0, window_bounds = array<i64: 1, 4, 4096>}, {pipeline_mode = #tpu.pipeline_mode<synchronous>, transform_indices = @transform_1, window_bounds = array<i64: 4, 16>}, {pipeline_mode = #tpu.pipeline_mode<synchronous>, transform_indices = @transform_2, window_bounds = array<i64: 4, 16>}, {pipeline_mode = #tpu.pipeline_mode<synchronous>, transform_indices = @transform_3, window_bounds = array<i64: 1, 16>}, {pipeline_mode = #tpu.pipeline_mode<synchronous>, transform_indices = @transform_4, window_bounds = array<i64: 4, 16>}, {pipeline_mode = #tpu.pipeline_mode<synchronous>, transform_indices = @transform_5, window_bounds = array<i64: 4, 1>}, {transform_indices = @transform_6, window_bounds = array<i64: 1, 4, 1>}]} {
    %c0_i32 = arith.constant 0 : i32
    %0 = arith.cmpi eq, %arg1, %c0_i32 : i32
    %1 = arith.extui %0 : i1 to i32
    %c0_i32_0 = arith.constant 0 : i32
    %2 = arith.cmpi ne, %1, %c0_i32_0 : i32
    scf.if %2 {
      %cst_14 = arith.constant 0.000000e+00 : f32
      %18 = vector.broadcast %cst_14 : f32 to vector<4x1xf32>
      %c0_15 = arith.constant 0 : index
      %c0_16 = arith.constant 0 : index
      %19 = vector.load %arg9[%c0_15, %c0_16] : memref<4x1xf32, #tpu.memory_space<vmem>>, vector<4x1xf32>
      tpu.vector_store %arg9[%c0_15, %c0_16], %18 {strides = array<i32>} : memref<4x1xf32, #tpu.memory_space<vmem>>, vector<4x1xf32>,
      %cst_17 = arith.constant 0xFF800000 : f32
      %20 = vector.broadcast %cst_17 : f32 to vector<4x1xf32>
      %c0_18 = arith.constant 0 : index
      %c0_19 = arith.constant 0 : index
      %21 = vector.load %arg10[%c0_18, %c0_19] : memref<4x1xf32, #tpu.memory_space<vmem>>, vector<4x1xf32>
      tpu.vector_store %arg10[%c0_18, %c0_19], %20 {strides = array<i32>} : memref<4x1xf32, #tpu.memory_space<vmem>>, vector<4x1xf32>,
    } else {
    }
    %c0 = arith.constant 0 : index
    %c0_1 = arith.constant 0 : index
    %c0_2 = arith.constant 0 : index
    %3 = vector.load %arg2[%c0, %c0_1, %c0_2] : memref<1x4x4096xf32, #tpu.memory_space<vmem>>, vector<1x4x4096xf32>
    %4 = vector.shape_cast %3 : vector<1x4x4096xf32> to vector<4x4096xf32>
    %c0_3 = arith.constant 0 : index
    %c0_4 = arith.constant 0 : index
    %5 = vector.load %arg9[%c0_3, %c0_4] : memref<4x1xf32, #tpu.memory_space<vmem>>, vector<4x1xf32>
    %cst = arith.constant dense<0.000000e+00> : vector<4xf32>
    %6 = vector.multi_reduction <add>, %4, %cst [1] : vector<4x4096xf32> to vector<4xf32>
    %7 = vector.shape_cast %6 : vector<4xf32> to vector<4x1xf32>
    %8 = arith.addf %5, %7 : vector<4x1xf32>
    %c0_5 = arith.constant 0 : index
    %c0_6 = arith.constant 0 : index
    %9 = vector.load %arg9[%c0_5, %c0_6] : memref<4x1xf32, #tpu.memory_space<vmem>>, vector<4x1xf32>
    tpu.vector_store %arg9[%c0_5, %c0_6], %8 {strides = array<i32>} : memref<4x1xf32, #tpu.memory_space<vmem>>, vector<4x1xf32>,
    %c0_7 = arith.constant 0 : index
    %c0_8 = arith.constant 0 : index
    %10 = vector.load %arg10[%c0_7, %c0_8] : memref<4x1xf32, #tpu.memory_space<vmem>>, vector<4x1xf32>
    %cst_9 = arith.constant dense<0xFF800000> : vector<4xf32>
    %11 = vector.multi_reduction <maximumf>, %4, %cst_9 [1] : vector<4x4096xf32> to vector<4xf32>
    %12 = vector.shape_cast %11 : vector<4xf32> to vector<4x1xf32>
    %13 = arith.maximumf %10, %12 : vector<4x1xf32>
    %c0_10 = arith.constant 0 : index
    %c0_11 = arith.constant 0 : index
    %14 = vector.load %arg10[%c0_10, %c0_11] : memref<4x1xf32, #tpu.memory_space<vmem>>, vector<4x1xf32>
    tpu.vector_store %arg10[%c0_10, %c0_11], %13 {strides = array<i32>} : memref<4x1xf32, #tpu.memory_space<vmem>>, vector<4x1xf32>,
    %c0_i32_12 = arith.constant 0 : i32
    %15 = arith.cmpi eq, %arg1, %c0_i32_12 : i32
    %16 = arith.extui %15 : i1 to i32
    %c0_i32_13 = arith.constant 0 : i32
    %17 = arith.cmpi ne, %16, %c0_i32_13 : i32
    scf.if %17 {
      %c0_14 = arith.constant 0 : index
      %c0_15 = arith.constant 0 : index
      %18 = vector.load %arg9[%c0_14, %c0_15] : memref<4x1xf32, #tpu.memory_space<vmem>>, vector<4x1xf32>
      %cst_16 = arith.constant 2.44140625E-4 : f32
      %19 = vector.broadcast %cst_16 : f32 to vector<4x1xf32>
      %20 = arith.mulf %18, %19 : vector<4x1xf32>
      %c0_17 = arith.constant 0 : index
      %c0_18 = arith.constant 0 : index
      %21 = vector.load %arg10[%c0_17, %c0_18] : memref<4x1xf32, #tpu.memory_space<vmem>>, vector<4x1xf32>
      %c0_19 = arith.constant 0 : index
      %c0_20 = arith.constant 0 : index
      %22 = vector.load %arg3[%c0_19, %c0_20] : memref<4x16xf32, #tpu.memory_space<vmem>>, vector<4x16xf32>
      %23 = vector.broadcast %20 : vector<4x1xf32> to vector<4x16xf32>
      %24 = arith.mulf %22, %23 : vector<4x16xf32>
      %c0_21 = arith.constant 0 : index
      %c0_22 = arith.constant 0 : index
      %25 = vector.load %arg4[%c0_21, %c0_22] : memref<4x16xf32, #tpu.memory_space<vmem>>, vector<4x16xf32>
      %26 = vector.broadcast %21 : vector<4x1xf32> to vector<4x16xf32>
      %27 = arith.mulf %25, %26 : vector<4x16xf32>
      %28 = arith.addf %24, %27 : vector<4x16xf32>
      %cst_23 = arith.constant dense<0.000000e+00> : vector<16xf32>
      %29 = vector.multi_reduction <add>, %28, %cst_23 [0] : vector<4x16xf32> to vector<16xf32>
      %30 = vector.shape_cast %29 : vector<16xf32> to vector<1x16xf32>
      %c0_24 = arith.constant 0 : index
      %c0_25 = arith.constant 0 : index
      %31 = vector.load %arg5[%c0_24, %c0_25] : memref<1x16xf32, #tpu.memory_space<vmem>>, vector<1x16xf32>
      %32 = arith.addf %30, %31 : vector<1x16xf32>
      %cst_26 = arith.constant 0.000000e+00 : f32
      %33 = vector.broadcast %cst_26 : f32 to vector<1x16xf32>
      %34 = arith.maximumf %32, %33 : vector<1x16xf32>
      %c0_27 = arith.constant 0 : index
      %c0_28 = arith.constant 0 : index
      %35 = vector.load %arg6[%c0_27, %c0_28] : memref<4x16xf32, #tpu.memory_space<vmem>>, vector<4x16xf32>
      %36 = vector.broadcast %34 : vector<1x16xf32> to vector<4x16xf32>
      %37 = arith.mulf %35, %36 : vector<4x16xf32>
      %cst_29 = arith.constant dense<0.000000e+00> : vector<4xf32>
      %38 = vector.multi_reduction <add>, %37, %cst_29 [1] : vector<4x16xf32> to vector<4xf32>
      %39 = vector.shape_cast %38 : vector<4xf32> to vector<4x1xf32>
      %c0_30 = arith.constant 0 : index
      %c0_31 = arith.constant 0 : index
      %40 = vector.load %arg7[%c0_30, %c0_31] : memref<4x1xf32, #tpu.memory_space<vmem>>, vector<4x1xf32>
      %41 = arith.addf %39, %40 : vector<4x1xf32>
      %42 = arith.negf %41 : vector<4x1xf32>
      %43 = math.exp %42 : vector<4x1xf32>
      %cst_32 = arith.constant 1.000000e+00 : f32
      %44 = vector.broadcast %cst_32 : f32 to vector<4x1xf32>
      %45 = arith.addf %44, %43 : vector<4x1xf32>
      %46 = arith.divf %44, %45 : vector<4x1xf32>
      %47 = vector.shape_cast %46 : vector<4x1xf32> to vector<1x4x1xf32>
      %c0_33 = arith.constant 0 : index
      %c0_34 = arith.constant 0 : index
      %c0_35 = arith.constant 0 : index
      %48 = vector.load %arg8[%c0_33, %c0_34, %c0_35] : memref<1x4x1xf32, #tpu.memory_space<vmem>>, vector<1x4x1xf32>
      tpu.vector_store %arg8[%c0_33, %c0_34, %c0_35], %47 {strides = array<i32>} : memref<1x4x1xf32, #tpu.memory_space<vmem>>, vector<1x4x1xf32>,
    } else {
    }
    return
  }
  func.func @transform_0(%arg0: i32, %arg1: i32) -> (i32, i32, i32) {
    %c0_i32 = arith.constant 0 : i32
    %c0_i32_0 = arith.constant 0 : i32
    return %arg0, %c0_i32, %arg1 : i32, i32, i32
  }
  func.func @transform_1(%arg0: i32, %arg1: i32) -> (i32, i32) {
    %c0_i32 = arith.constant 0 : i32
    %c0_i32_0 = arith.constant 0 : i32
    %c0_i32_1 = arith.constant 0 : i32
    return %c0_i32, %c0_i32_0 : i32, i32
  }
  func.func @transform_2(%arg0: i32, %arg1: i32) -> (i32, i32) {
    %c0_i32 = arith.constant 0 : i32
    %c0_i32_0 = arith.constant 0 : i32
    %c0_i32_1 = arith.constant 0 : i32
    return %c0_i32, %c0_i32_0 : i32, i32
  }
  func.func @transform_3(%arg0: i32, %arg1: i32) -> (i32, i32) {
    %c0_i32 = arith.constant 0 : i32
    %c0_i32_0 = arith.constant 0 : i32
    %c0_i32_1 = arith.constant 0 : i32
    return %c0_i32, %c0_i32_0 : i32, i32
  }
  func.func @transform_4(%arg0: i32, %arg1: i32) -> (i32, i32) {
    %c0_i32 = arith.constant 0 : i32
    %c0_i32_0 = arith.constant 0 : i32
    %c0_i32_1 = arith.constant 0 : i32
    return %c0_i32, %c0_i32_0 : i32, i32
  }
  func.func @transform_5(%arg0: i32, %arg1: i32) -> (i32, i32) {
    %c0_i32 = arith.constant 0 : i32
    %c0_i32_0 = arith.constant 0 : i32
    %c0_i32_1 = arith.constant 0 : i32
    return %c0_i32, %c0_i32_0 : i32, i32
  }
  func.func @transform_6(%arg0: i32, %arg1: i32) -> (i32, i32, i32) {
    %c0_i32 = arith.constant 0 : i32
    %c0_i32_0 = arith.constant 0 : i32
    %c0_i32_1 = arith.constant 0 : i32
    return %arg0, %c0_i32, %c0_i32_0 : i32, i32, i32
  }
}

</mosaic_0001>

<llo_original>
// kernel: tpu_custom_call.1
$region0: #{tpu_custom_call.1}
  #allocation0 [shape = 'u32[]', space=smem, size = 0x4, offset = 0x4, fixed_abs, tag = 'smem constant byte address 0x4 - core index']
  #allocation1 [shape = 'u32[144,128]{1,0:T(1,128)}', space=vmem, size = 0x12000, scoped, tag = 'internal scratch']
  #allocation2 [shape = 'f32[4,1]{1,0:T(4,128)}', space=vmem, size = 0x800, scoped, tag = 'scratch operand']
  #allocation3 [shape = 'f32[4,1]{1,0:T(4,128)}', space=vmem, size = 0x800, scoped, tag = 'scratch operand']
  %s0 = inlined_call_operand.hbm [shape: f32[2,4,4096], index: 0, kind: input, shape index: {}]
  %s1 = inlined_call_operand.vmem [shape: f32[4,16], index: 1, kind: input, shape index: {}]
  %s2 = inlined_call_operand.vmem [shape: f32[4,16], index: 2, kind: input, shape index: {}]
  %s3 = inlined_call_operand.vmem [shape: f32[1,16], index: 3, kind: input, shape index: {}]
  %s4 = inlined_call_operand.vmem [shape: f32[4,16], index: 4, kind: input, shape index: {}]
  %s5 = inlined_call_operand.vmem [shape: f32[4,1], index: 5, kind: input, shape index: {}]
  %s6 = inlined_call_operand.vmem [shape: f32[2,4,1], index: 6, kind: output, shape index: {}]
  %s7 = sld [smem:[#allocation0]]
  $region69: #{tpu_custom_call.1} parent=0
    _
  %s9 = ssub.s32 1, %s7
  %s10 = scalar_select 0, %s9, %s7
  $region1: #{tpu_custom_call.1} parent=0
    #allocation4 [shape = 'u8[131072]{0}', space=vmem, size = 0x20000, scoped, tag = 'input window, operand 0']
    #allocation5 [shape = 's32[2]{0}', space=sflag, size = 0x8, scoped, tag = 'scoped memory for tpu_custom_call.1']
    %11 = vsyncpa [#allocation5], 0
    %s12 = scalar_lea.sflag [#allocation5], 1
    %13 = vsyncpa %s12, 0
    loop: start=0, step=1, limit=4
    $region2: #{tpu_custom_call.1} parent=1 // loop_pre_header
      _
    $region3: #{tpu_custom_call.1} parent=1 // loop_header
      %s15 = sphi 0, %s19
      %p16 = scmp.ge.s32.totalorder %s15, 4
      %s22 = sphi 0, %s34
      %s23 = sphi 0, %s30
      %s24 = sphi 0, %s22
      %s25 = sphi 0, %s23
      %s26 = sphi 0, %s24
      %s27 = sphi 0, %s25
      %s39 = sphi 0, %s41
      %s42 = sphi 0, %s39
      %s43 = sphi 0, %s42
      %s59 = sphi 0, %s43
      %s63 = sphi 0, %s63
      %s65 = sphi 0, %s63
      %s66 = sphi 0, %s65
      %s80 = sphi 0, %s66
      %s84 = sphi 0, %s84
      %s86 = sphi 0, %s84
      %s87 = sphi 0, %s86
      %s101 = sphi 0, %s87
      %s105 = sphi 0, %s105
      %s107 = sphi 0, %s105
      %s108 = sphi 0, %s107
      %s122 = sphi 0, %s108
      %s126 = sphi 0, %s126
      %s128 = sphi 0, %s126
      %s129 = sphi 0, %s128
      %s143 = sphi 0, %s129
      %s147 = sphi 0, %s147
      %s149 = sphi 0, %s147
      %s150 = sphi 0, %s149
      %s164 = sphi 0, %s150
      %s170 = sphi 0, %s172
      %s173 = sphi 0, %s170
      %s174 = sphi 0, %s173
      %s190 = sphi 0, %s174
    $region4: #{tpu_custom_call.1} parent=1 // loop_header_branch
      %18 = sbr.rel (%p16) target = $region8
    $region5: #{tpu_custom_call.1} parent=1 // loop_body
      %s20 = ssub.s32 %s15, 1
      %s21 = ssub.s32 %s15, 2
      %s28 = sadd.s32 1, %s23
      %p29 = scmp.ge.s32.totalorder %s28, 1
      %s30 = scalar_select %p29, 0, %s28
      %s31 = sadd.s32 1, %s22
      %s32 = scalar_select %p29, %s31, %s22
      %p33 = scmp.ge.s32.totalorder %s32, 2
      %s34 = scalar_select %p33, 0, %s32
      %s35 = ssub.s32 %s22, %s34
      %s36 = ssub.s32 %s23, %s30
      %s37 = sor.u32 %s35, %s36
      %p38 = scmp.eq.s32.totalorder %s37, 0
      %s40 = sadd.s32 %s39, 1
      %s41 = scalar_select %p38, %s39, %s40
      %p44 = pneg %p38
      %p45 = scmp.eq.s32.totalorder %s15, 1
      %p46 = por %p44, %p45
      %p47 = scmp.ne.s32.totalorder %s39, %s42
      %p48 = scmp.eq.s32.totalorder %s15, 0
      %p49 = por %p47, %p48
      %p50 = scmp.ne.s32.totalorder %s39, %s42
      %p51 = scmp.eq.s32.totalorder %s20, 1
      %p52 = por %p50, %p51
      %p53 = scmp.ne.s32.totalorder %s42, %s43
      %p54 = scmp.eq.s32.totalorder %s20, 0
      %p55 = por %p53, %p54
      %p56 = scmp.ne.s32.totalorder %s42, %s43
      %p57 = scmp.eq.s32.totalorder %s21, 1
      %p58 = por %p56, %p57
      %p60 = scmp.ne.s32.totalorder %s43, %s59
      %p61 = scmp.eq.s32.totalorder %s21, 0
      %p62 = por %p60, %p61
      %s64 = sadd.s32 %s63, 1
      %p67 = scmp.eq.s32.totalorder %s15, 1
      %p68 = scmp.ne.s32.totalorder %s63, %s65
      %p69 = scmp.eq.s32.totalorder %s15, 0
      %p70 = por %p68, %p69
      %p71 = scmp.ne.s32.totalorder %s63, %s65
      %p72 = scmp.eq.s32.totalorder %s20, 1
      %p73 = por %p71, %p72
      %p74 = scmp.ne.s32.totalorder %s65, %s66
      %p75 = scmp.eq.s32.totalorder %s20, 0
      %p76 = por %p74, %p75
      %p77 = scmp.ne.s32.totalorder %s65, %s66
      %p78 = scmp.eq.s32.totalorder %s21, 1
      %p79 = por %p77, %p78
      %p81 = scmp.ne.s32.totalorder %s66, %s80
      %p82 = scmp.eq.s32.totalorder %s21, 0
      %p83 = por %p81, %p82
      %s85 = sadd.s32 %s84, 1
      %p88 = scmp.eq.s32.totalorder %s15, 1
      %p89 = scmp.ne.s32.totalorder %s84, %s86
      %p90 = scmp.eq.s32.totalorder %s15, 0
      %p91 = por %p89, %p90
      %p92 = scmp.ne.s32.totalorder %s84, %s86
      %p93 = scmp.eq.s32.totalorder %s20, 1
      %p94 = por %p92, %p93
      %p95 = scmp.ne.s32.totalorder %s86, %s87
      %p96 = scmp.eq.s32.totalorder %s20, 0
      %p97 = por %p95, %p96
      %p98 = scmp.ne.s32.totalorder %s86, %s87
      %p99 = scmp.eq.s32.totalorder %s21, 1
      %p100 = por %p98, %p99
      %p102 = scmp.ne.s32.totalorder %s87, %s101
      %p103 = scmp.eq.s32.totalorder %s21, 0
      %p104 = por %p102, %p103
      %s106 = sadd.s32 %s105, 1
      %p109 = scmp.eq.s32.totalorder %s15, 1
      %p110 = scmp.ne.s32.totalorder %s105, %s107
      %p111 = scmp.eq.s32.totalorder %s15, 0
      %p112 = por %p110, %p111
      %p113 = scmp.ne.s32.totalorder %s105, %s107
      %p114 = scmp.eq.s32.totalorder %s20, 1
      %p115 = por %p113, %p114
      %p116 = scmp.ne.s32.totalorder %s107, %s108
      %p117 = scmp.eq.s32.totalorder %s20, 0
      %p118 = por %p116, %p117
      %p119 = scmp.ne.s32.totalorder %s107, %s108
      %p120 = scmp.eq.s32.totalorder %s21, 1
      %p121 = por %p119, %p120
      %p123 = scmp.ne.s32.totalorder %s108, %s122
      %p124 = scmp.eq.s32.totalorder %s21, 0
      %p125 = por %p123, %p124
      %s127 = sadd.s32 %s126, 1
      %p130 = scmp.eq.s32.totalorder %s15, 1
      %p131 = scmp.ne.s32.totalorder %s126, %s128
      %p132 = scmp.eq.s32.totalorder %s15, 0
      %p133 = por %p131, %p132
      %p134 = scmp.ne.s32.totalorder %s126, %s128
      %p135 = scmp.eq.s32.totalorder %s20, 1
      %p136 = por %p134, %p135
      %p137 = scmp.ne.s32.totalorder %s128, %s129
      %p138 = scmp.eq.s32.totalorder %s20, 0
      %p139 = por %p137, %p138
      %p140 = scmp.ne.s32.totalorder %s128, %s129
      %p141 = scmp.eq.s32.totalorder %s21, 1
      %p142 = por %p140, %p141
      %p144 = scmp.ne.s32.totalorder %s129, %s143
      %p145 = scmp.eq.s32.totalorder %s21, 0
      %p146 = por %p144, %p145
      %s148 = sadd.s32 %s147, 1
      %p151 = scmp.eq.s32.totalorder %s15, 1
      %p152 = scmp.ne.s32.totalorder %s147, %s149
      %p153 = scmp.eq.s32.totalorder %s15, 0
      %p154 = por %p152, %p153
      %p155 = scmp.ne.s32.totalorder %s147, %s149
      %p156 = scmp.eq.s32.totalorder %s20, 1
      %p157 = por %p155, %p156
      %p158 = scmp.ne.s32.totalorder %s149, %s150
      %p159 = scmp.eq.s32.totalorder %s20, 0
      %p160 = por %p158, %p159
      %p161 = scmp.ne.s32.totalorder %s149, %s150
      %p162 = scmp.eq.s32.totalorder %s21, 1
      %p163 = por %p161, %p162
      %p165 = scmp.ne.s32.totalorder %s150, %s164
      %p166 = scmp.eq.s32.totalorder %s21, 0
      %p167 = por %p165, %p166
      %s168 = ssub.s32 %s22, %s34
      %p169 = scmp.eq.s32.totalorder %s168, 0
      %s171 = sadd.s32 %s170, 1
      %s172 = scalar_select %p169, %s170, %s171
      %p175 = pneg %p169
      %p176 = scmp.eq.s32.totalorder %s15, 1
      %p177 = por %p175, %p176
      %p178 = scmp.ne.s32.totalorder %s170, %s173
      %p179 = scmp.eq.s32.totalorder %s15, 0
      %p180 = por %p178, %p179
      %p181 = scmp.ne.s32.totalorder %s170, %s173
      %p182 = scmp.eq.s32.totalorder %s20, 1
      %p183 = por %p181, %p182
      %p184 = scmp.ne.s32.totalorder %s173, %s174
      %p185 = scmp.eq.s32.totalorder %s20, 0
      %p186 = por %p184, %p185
      %p187 = scmp.ne.s32.totalorder %s173, %s174
      %p188 = scmp.eq.s32.totalorder %s21, 1
      %p189 = por %p187, %p188
      %p191 = scmp.ne.s32.totalorder %s174, %s190
      %p192 = scmp.eq.s32.totalorder %s21, 0
      %p193 = por %p191, %p192
      %p194 = scmp.le.s32.totalorder 1, %s15
      %p195 = scmp.lt.s32.totalorder %s15, 3
      %p196 = pnand %p194, %p195
      %p197 = pneg %p196
      // Predicated region
      $region9: #{tpu_custom_call.1} parent=5 // pred_check
        _
      $region10: #{tpu_custom_call.1} parent=5 // pred_check_branch
        %199 = sbr.rel (%p196) target = $region12
      $region11: #{tpu_custom_call.1} parent=5 // pred_region
        %s200 = ssub.s32 %s15, 1
        // Predicated region
        $region13: #{tpu_custom_call.1} parent=11 // pred_check
          %p201 = pneg %p76
        $region14: #{tpu_custom_call.1} parent=11 // pred_check_branch
          %203 = sbr.rel (%p201) target = $region16
        $region15: #{tpu_custom_call.1} parent=11 // pred_region
          _
        $region16: #{tpu_custom_call.1} parent=11 // pred_fallthru
          _
        // Predicated region
        $region17: #{tpu_custom_call.1} parent=11 // pred_check
          %p204 = pneg %p97
        $region18: #{tpu_custom_call.1} parent=11 // pred_check_branch
          %206 = sbr.rel (%p204) target = $region20
        $region19: #{tpu_custom_call.1} parent=11 // pred_region
          _
        $region20: #{tpu_custom_call.1} parent=11 // pred_fallthru
          _
        // Predicated region
        $region21: #{tpu_custom_call.1} parent=11 // pred_check
          %p207 = pneg %p118
        $region22: #{tpu_custom_call.1} parent=11 // pred_check_branch
          %209 = sbr.rel (%p207) target = $region24
        $region23: #{tpu_custom_call.1} parent=11 // pred_region
          _
        $region24: #{tpu_custom_call.1} parent=11 // pred_fallthru
          _
        // Predicated region
        $region25: #{tpu_custom_call.1} parent=11 // pred_check
          %p210 = pneg %p139
        $region26: #{tpu_custom_call.1} parent=11 // pred_check_branch
          %212 = sbr.rel (%p210) target = $region28
        $region27: #{tpu_custom_call.1} parent=11 // pred_region
          _
        $region28: #{tpu_custom_call.1} parent=11 // pred_fallthru
          _
        // Predicated region
        $region29: #{tpu_custom_call.1} parent=11 // pred_check
          %p213 = pneg %p160
        $region30: #{tpu_custom_call.1} parent=11 // pred_check_branch
          %215 = sbr.rel (%p213) target = $region32
        $region31: #{tpu_custom_call.1} parent=11 // pred_region
          _
        $region32: #{tpu_custom_call.1} parent=11 // pred_fallthru
          _
      $region12: #{tpu_custom_call.1} parent=5 // pred_fallthru
        _
      %p216 = scmp.lt.s32.totalorder %s15, 2
      // Predicated region
      $region33: #{tpu_custom_call.1} parent=5 // pred_check
        %p217 = pneg %p216
      $region34: #{tpu_custom_call.1} parent=5 // pred_check_branch
        %219 = sbr.rel (%p217) target = $region36
      $region35: #{tpu_custom_call.1} parent=5 // pred_region
        // Predicated region
        $region37: #{tpu_custom_call.1} parent=35 // pred_check
          %p220 = pneg %p49
        $region38: #{tpu_custom_call.1} parent=35 // pred_check_branch
          %222 = sbr.rel (%p220) target = $region40
        $region39: #{tpu_custom_call.1} parent=35 // pred_region
          %s223 = sand.u32 %s39, 1
          %s224 = scalar_lea.sflag [#allocation5], %s223
          %s225 = sand.u32 %s39, 1
          %s226 = smul.addr %s225, 128
          %s227 = scalar_lea.vmem [#allocation4], %s226
          %s228 = smul.u32 32, %s23
          %s230 = ssub.s32 2048, 2048
          %231 = vsyncadd %s224, %s230
          %s232 = smul.addr %s22, 32
          %s233 = sadd.s32 %s228, %s232
          %s234 = smul.addr %s233, 64
          %s235 = scalar_lea.hbm %s0, %s234
          %s237 = sshll.u32 %s227, 4
          %s238 = int_to_ptr.vmem [resolvable:$true] %s237
          %240 = dma.hbm_to_vmem [thread:$0]  %s235, 2048, %s238, %s224
        $region40: #{tpu_custom_call.1} parent=35 // pred_fallthru
          _
      $region36: #{tpu_custom_call.1} parent=5 // pred_fallthru
        _
      %p241 = scmp.le.s32.totalorder 1, %s15
      %p242 = scmp.lt.s32.totalorder %s15, 3
      %p243 = pnand %p241, %p242
      %p244 = pneg %p243
      // Predicated region
      $region41: #{tpu_custom_call.1} parent=5 // pred_check
        _
      $region42: #{tpu_custom_call.1} parent=5 // pred_check_branch
        %246 = sbr.rel (%p243) target = $region44
      $region43: #{tpu_custom_call.1} parent=5 // pred_region
        %s247 = ssub.s32 %s15, 1
        %s248 = sand.u32 %s42, 1
        %s249 = scalar_lea.sflag [#allocation5], %s248
        %s250 = sand.u32 %s42, 1
        %s251 = smul.addr %s250, 128
        %s252 = scalar_lea.vmem [#allocation4], %s251
        // Predicated region
        $region45: #{tpu_custom_call.1} parent=43 // pred_check
          %p253 = pneg %p55
        $region46: #{tpu_custom_call.1} parent=43 // pred_check_branch
          %255 = sbr.rel (%p253) target = $region48
        $region47: #{tpu_custom_call.1} parent=43 // pred_region
          %256 = dma.done %s249, 2048
        $region48: #{tpu_custom_call.1} parent=43 // pred_fallthru
          _
        %s257 = sand.u32 %s42, 1
        %s258 = scalar_lea.sflag [#allocation5], %s257
        %s259 = sand.u32 %s42, 1
        %s260 = smul.addr %s259, 128
        %s261 = scalar_lea.vmem [#allocation4], %s260
        %p262 = pneg %p55
        %p263 = pneg %p52
        %p264 = pneg %p76
        %p265 = pneg %p73
        %p266 = pneg %p97
        %p267 = pneg %p94
        %p268 = pneg %p118
        %p269 = pneg %p115
        %p270 = pneg %p139
        %p271 = pneg %p136
        %p272 = pneg %p160
        %p273 = pneg %p157
        %p274 = pneg %p186
        %p275 = pneg %p183
        %p276 = scmp.lt.s32.totalorder %s24, 1
        %s277 = scalar_select %p276, %s24, 1
        %s278 = smul.addr %s277, 4
        %s279 = scalar_lea.vmem %s6, %s278
        %s280 = smul.u32 32, %s25
        %p281 = scmp.lt.s32.totalorder %s24, 1
        %s282 = scalar_select %p281, %s24, 1
        %s283 = smul.addr %s282, 4
        %s284 = scalar_lea.vmem %s6, %s283
        %p285 = scmp.eq.s32.totalorder %s25, 0
        // Predicated region
        $region49: #{tpu_custom_call.1} parent=43 // pred_check
          %p286 = pneg %p285
        $region50: #{tpu_custom_call.1} parent=43 // pred_check_branch
          %288 = sbr.rel (%p286) target = $region52
        $region51: #{tpu_custom_call.1} parent=43 // pred_region
          %vm289 = vcmask 3072
          %290 = vst.msk [vmem:[#allocation2] sm:$0xf] %vm289, 0.0
          %291 = vst.msk [vmem:[#allocation3] sm:$0xf] %vm289, -inf
        $region52: #{tpu_custom_call.1} parent=43 // pred_fallthru
          _
        %v292 = vld [vmem:[%s252] sm:$0xff]
        %v293 = vld [vmem:[%s252 + $0x8] sm:$0xff]
        %v294 = vld [vmem:[%s252 + $0x10] sm:$0xff]
        %v295 = vld [vmem:[%s252 + $0x18] sm:$0xff]
        %v296 = vld [vmem:[%s252 + $0x20] sm:$0xff]
        %v297 = vld [vmem:[%s252 + $0x28] sm:$0xff]
        %v298 = vld [vmem:[%s252 + $0x30] sm:$0xff]
        %v299 = vld [vmem:[%s252 + $0x38] sm:$0xff]
        %v300 = vld [vmem:[%s252 + $0x40] sm:$0xff]
        %v301 = vld [vmem:[%s252 + $0x48] sm:$0xff]
        %v302 = vld [vmem:[%s252 + $0x50] sm:$0xff]
        %v303 = vld [vmem:[%s252 + $0x58] sm:$0xff]
        %v304 = vld [vmem:[%s252 + $0x60] sm:$0xff]
        %v305 = vld [vmem:[%s252 + $0x68] sm:$0xff]
        %v306 = vld [vmem:[%s252 + $0x70] sm:$0xff]
        %v307 = vld [vmem:[%s252 + $0x78] sm:$0xff]
        %v308 = vld [vmem:[#allocation2] sm:$0xf]
        %v325 = vcombine.high %v292, %v292
        %v326 = vcombine.high %v293, %v293
        %v327 = vcombine.high %v294, %v294
        %v328 = vcombine.high %v295, %v295
        %v329 = vcombine.high %v296, %v296
        %v330 = vcombine.high %v297, %v297
        %v331 = vcombine.high %v298, %v298
        %v332 = vcombine.high %v299, %v299
        %v333 = vcombine.high %v300, %v300
        %v334 = vcombine.high %v301, %v301
        %v335 = vcombine.high %v302, %v302
        %v336 = vcombine.high %v303, %v303
        %v337 = vcombine.high %v304, %v304
        %v338 = vcombine.high %v305, %v305
        %v339 = vcombine.high %v306, %v306
        %v340 = vcombine.high %v307, %v307
        %vm357 = vcmask 1043456
        %v358 = vsel %vm357, %v292, 0.0
        %v359 = vsel %vm357, %v325, 0.0
        %v360 = vadd.f32 %v358, %v359
        %v361 = vsel %vm357, %v293, 0.0
        %v362 = vadd.f32 %v360, %v361
        %v363 = vsel %vm357, %v326, 0.0
        %v364 = vadd.f32 %v362, %v363
        %v365 = vsel %vm357, %v294, 0.0
        %v366 = vadd.f32 %v364, %v365
        %v367 = vsel %vm357, %v327, 0.0
        %v368 = vadd.f32 %v366, %v367
        %v369 = vsel %vm357, %v295, 0.0
        %v370 = vadd.f32 %v368, %v369
        %v371 = vsel %vm357, %v328, 0.0
        %v372 = vadd.f32 %v370, %v371
        %v373 = vsel %vm357, %v296, 0.0
        %v374 = vadd.f32 %v372, %v373
        %v375 = vsel %vm357, %v329, 0.0
        %v376 = vadd.f32 %v374, %v375
        %v377 = vsel %vm357, %v297, 0.0
        %v378 = vadd.f32 %v376, %v377
        %v379 = vsel %vm357, %v330, 0.0
        %v380 = vadd.f32 %v378, %v379
        %v381 = vsel %vm357, %v298, 0.0
        %v382 = vadd.f32 %v380, %v381
        %v383 = vsel %vm357, %v331, 0.0
        %v384 = vadd.f32 %v382, %v383
        %v385 = vsel %vm357, %v299, 0.0
        %v386 = vadd.f32 %v384, %v385
        %v387 = vsel %vm357, %v332, 0.0
        %v388 = vadd.f32 %v386, %v387
        %v389 = vsel %vm357, %v300, 0.0
        %v390 = vadd.f32 %v388, %v389
        %v391 = vsel %vm357, %v333, 0.0
        %v392 = vadd.f32 %v390, %v391
        %v393 = vsel %vm357, %v301, 0.0
        %v394 = vadd.f32 %v392, %v393
        %v395 = vsel %vm357, %v334, 0.0
        %v396 = vadd.f32 %v394, %v395
        %v397 = vsel %vm357, %v302, 0.0
        %v398 = vadd.f32 %v396, %v397
        %v399 = vsel %vm357, %v335, 0.0
        %v400 = vadd.f32 %v398, %v399
        %v401 = vsel %vm357, %v303, 0.0
        %v402 = vadd.f32 %v400, %v401
        %v403 = vsel %vm357, %v336, 0.0
        %v404 = vadd.f32 %v402, %v403
        %v405 = vsel %vm357, %v304, 0.0
        %v406 = vadd.f32 %v404, %v405
        %v407 = vsel %vm357, %v337, 0.0
        %v408 = vadd.f32 %v406, %v407
        %v409 = vsel %vm357, %v305, 0.0
        %v410 = vadd.f32 %v408, %v409
        %v411 = vsel %vm357, %v338, 0.0
        %v412 = vadd.f32 %v410, %v411
        %v413 = vsel %vm357, %v306, 0.0
        %v414 = vadd.f32 %v412, %v413
        %v415 = vsel %vm357, %v339, 0.0
        %v416 = vadd.f32 %v414, %v415
        %v417 = vsel %vm357, %v307, 0.0
        %v418 = vadd.f32 %v416, %v417
        %v419 = vsel %vm357, %v340, 0.0
        %v420 = vadd.f32 %v418, %v419
        %421 = vadd.xlane.f32.xlu0 %v420
        %v422 = vpop.xlane.xlu0 %421
        %v423 = vadd.f32 %v308, %v422
        %vm424 = vcmask 3072
        %425 = vst.msk [vmem:[#allocation2] sm:$0xf] %vm424, %v423
        %v426 = vld [vmem:[#allocation3] sm:$0xf]
        %v427 = vsel %vm357, %v292, -inf
        %v428 = vsel %vm357, %v325, -inf
        %v429 = vsel %vm357, %v293, -inf
        %v430 = vsel %vm357, %v326, -inf
        %v431 = vsel %vm357, %v294, -inf
        %v432 = vmax.f32 %v427, %v431
        %v433 = vsel %vm357, %v327, -inf
        %v434 = vmax.f32 %v428, %v433
        %v435 = vsel %vm357, %v295, -inf
        %v436 = vmax.f32 %v429, %v435
        %v437 = vsel %vm357, %v328, -inf
        %v438 = vmax.f32 %v430, %v437
        %v439 = vsel %vm357, %v296, -inf
        %v440 = vmax.f32 %v432, %v439
        %v441 = vsel %vm357, %v329, -inf
        %v442 = vmax.f32 %v434, %v441
        %v443 = vsel %vm357, %v297, -inf
        %v444 = vmax.f32 %v436, %v443
        %v445 = vsel %vm357, %v330, -inf
        %v446 = vmax.f32 %v438, %v445
        %v447 = vsel %vm357, %v298, -inf
        %v448 = vmax.f32 %v440, %v447
        %v449 = vsel %vm357, %v331, -inf
        %v450 = vmax.f32 %v442, %v449
        %v451 = vsel %vm357, %v299, -inf
        %v452 = vmax.f32 %v444, %v451
        %v453 = vsel %vm357, %v332, -inf
        %v454 = vmax.f32 %v446, %v453
        %v455 = vsel %vm357, %v300, -inf
        %v456 = vmax.f32 %v448, %v455
        %v457 = vsel %vm357, %v333, -inf
        %v458 = vmax.f32 %v450, %v457
        %v459 = vsel %vm357, %v301, -inf
        %v460 = vmax.f32 %v452, %v459
        %v461 = vsel %vm357, %v334, -inf
        %v462 = vmax.f32 %v454, %v461
        %v463 = vsel %vm357, %v302, -inf
        %v464 = vmax.f32 %v456, %v463
        %v465 = vsel %vm357, %v335, -inf
        %v466 = vmax.f32 %v458, %v465
        %v467 = vsel %vm357, %v303, -inf
        %v468 = vmax.f32 %v460, %v467
        %v469 = vsel %vm357, %v336, -inf
        %v470 = vmax.f32 %v462, %v469
        %v471 = vsel %vm357, %v304, -inf
        %v472 = vmax.f32 %v464, %v471
        %v473 = vsel %vm357, %v337, -inf
        %v474 = vmax.f32 %v466, %v473
        %v475 = vsel %vm357, %v305, -inf
        %v476 = vmax.f32 %v468, %v475
        %v477 = vsel %vm357, %v338, -inf
        %v478 = vmax.f32 %v470, %v477
        %v479 = vsel %vm357, %v306, -inf
        %v480 = vmax.f32 %v472, %v479
        %v481 = vsel %vm357, %v339, -inf
        %v482 = vmax.f32 %v474, %v481
        %v483 = vsel %vm357, %v307, -inf
        %v484 = vmax.f32 %v476, %v483
        %v485 = vsel %vm357, %v340, -inf
        %v486 = vmax.f32 %v478, %v485
        %v487 = vmax.f32 %v480, %v482
        %v488 = vmax.f32 %v484, %v486
        %v489 = vmax.f32 %v487, %v488
        %490 = vmax.xlane.f32.xlu0 %v489
        %v491 = vpop.xlane.xlu0 %490
        %v492 = vmax.f32 %v426, %v491
        %493 = vst.msk [vmem:[#allocation3] sm:$0xf] %vm424, %v492
        // Predicated region
        $region53: #{tpu_custom_call.1} parent=43 // pred_check
          %p494 = pneg %p285
        $region54: #{tpu_custom_call.1} parent=43 // pred_check_branch
          %496 = sbr.rel (%p494) target = $region56
        $region55: #{tpu_custom_call.1} parent=43 // pred_region
          %v497 = vld [vmem:[#allocation2] sm:$0xf]
          %v498 = vmul.f32 %v497, 0.00024414063
          %v499 = vld [vmem:[#allocation3] sm:$0xf]
          %v500 = vld [vmem:[%s1] sm:$0xf]
          %502 = vset.pattern.permute.xlu0 0
          %503 = vperm.xlu0 %502, %v498
          %v504 = vpop.permute.xlu0 %503
          %v506 = vmul.f32 %v500, %v504
          %v507 = vld [vmem:[%s2] sm:$0xf]
          %509 = vset.pattern.permute.xlu0 0
          %510 = vperm.xlu0 %509, %v499
          %v511 = vpop.permute.xlu0 %510
          %v513 = vmul.f32 %v507, %v511
          %v514 = vadd.f32 %v506, %v513
          %vm515 = vcmask 125952
          %v516 = vsel %vm515, %v514, 0.0
          %v517 = vrot.slane %v516, 4
          %v518 = vadd.f32 %v516, %v517
          %v519 = vrot.slane %v518, 2
          %v520 = vadd.f32 %v518, %v519
          %v521 = vrot.slane %v520, 1
          %v522 = vadd.f32 %v520, %v521
          %v523 = vld [vmem:[%s3] sm:$0x1]
          %v524 = vadd.f32 %v522, %v523
          %v525 = vmax.f32 %v524, 0.0
          %v526 = vld [vmem:[%s4] sm:$0xf]
          %v527 = vlaneseq
          %v528 = vshrl.u32 %v527, 7
          %v529 = vsub.s32 0, %v528
          %v530 = vrot.slane %v525, %v529
          %v531 = vmul.f32 %v526, %v530
          %v532 = vsel %vm515, %v531, 0.0
          %533 = vadd.xlane.f32.xlu0 %v532
          %v534 = vpop.xlane.xlu0 %533
          %v535 = vld [vmem:[%s5] sm:$0xf]
          %v536 = vadd.f32 %v534, %v535
          %v537 = vxor.u32 %v536, 2147483648
          %v538 = vmul.f32 %v537, 1.442695
          %v539 = vpow.pop %v538
          %v540 = vadd.f32 %v539, 1.0
          %v541 = vrcp.pop %v540
          %v542 = vmul.f32 1.0, %v541
          %543 = vst.msk [vmem:[%s284] sm:$0xf] %vm424, %v542
        $region56: #{tpu_custom_call.1} parent=43 // pred_fallthru
          _
        %p544 = scmp.lt.s32.totalorder %s24, 1
        %s545 = scalar_select %p544, %s24, 1
        %s546 = smul.addr %s545, 4
        %s547 = scalar_lea.vmem %s6, %s546
        // Predicated region
        $region57: #{tpu_custom_call.1} parent=43 // pred_check
          %p548 = pneg %p183
        $region58: #{tpu_custom_call.1} parent=43 // pred_check_branch
          %550 = sbr.rel (%p548) target = $region60
        $region59: #{tpu_custom_call.1} parent=43 // pred_region
          _
        $region60: #{tpu_custom_call.1} parent=43 // pred_fallthru
          _
      $region44: #{tpu_custom_call.1} parent=5 // pred_fallthru
        _
      %p551 = scmp.le.s32.totalorder 2, %s15
      // Predicated region
      $region61: #{tpu_custom_call.1} parent=5 // pred_check
        %p552 = pneg %p551
      $region62: #{tpu_custom_call.1} parent=5 // pred_check_branch
        %554 = sbr.rel (%p552) target = $region64
      $region63: #{tpu_custom_call.1} parent=5 // pred_region
        %s555 = ssub.s32 %s15, 2
        // Predicated region
        $region65: #{tpu_custom_call.1} parent=63 // pred_check
          %p556 = pneg %p189
        $region66: #{tpu_custom_call.1} parent=63 // pred_check_branch
          %558 = sbr.rel (%p556) target = $region68
        $region67: #{tpu_custom_call.1} parent=63 // pred_region
          %p559 = scmp.lt.s32.totalorder %s26, 1
          %s560 = scalar_select %p559, %s26, 1
          %s561 = smul.addr %s560, 4
          %s562 = scalar_lea.vmem %s6, %s561
        $region68: #{tpu_custom_call.1} parent=63 // pred_fallthru
          _
      $region64: #{tpu_custom_call.1} parent=5 // pred_fallthru
        _
    $region6: #{tpu_custom_call.1} parent=1 // loop_footer
      %s19 = sadd.s32 1, %s15
    $region7: #{tpu_custom_call.1} parent=1 // loop_footer_branch
      %14 = sbr.rel target = $region3
    $region8: #{tpu_custom_call.1} parent=1 // loop_exit
      _
    %563 = vsyncpa [#allocation5], 1
    %s564 = scalar_lea.sflag [#allocation5], 1
    %565 = vsyncpa %s564, 1

</llo_original>
